<compile_context>
chip_gen: v7x
topology: tpu7x:2x2x1
jax: 0.10.0
libtpu: 0.0.40
codegen_flags: <defaults>
</compile_context>

<pallas_src>
import jax
import jax.numpy as jnp
from jax.experimental import pallas as pl
from jax.experimental.pallas import tpu as pltpu

_LANES = 128
_MiB = 1024 * 1024


def _round_up(x, m):
    return ((x + m - 1) // m) * m


# ---------------------------------------------------------------------------
# Fast path: degenerate 1x1 Linear -> lane-dense VPU FMA.
# ---------------------------------------------------------------------------
def _fma_kernel(w_ref, b_ref, x_ref, o_ref):
    # w_ref / b_ref: (1, 1) f32 scalars in SMEM; x_ref / o_ref: (tr, 128) VMEM.
    o_ref[...] = (x_ref[...] * w_ref[0, 0] + b_ref[0, 0]).astype(o_ref.dtype)


def _linear_1x1(x, weight, bias):
    n = x.shape[0]
    rows = pl.cdiv(n, _LANES)
    n_pad = rows * _LANES                        # pad only to next 128 multiple
    flat = x.reshape(-1)
    if n_pad != n:
        flat = jnp.pad(flat, (0, n_pad - n))
    x2d = flat.reshape(rows, _LANES)             # N on the lane axis

    # ~4096-row tiles (2 MiB f32): input + output double buffers ~8 MiB, which
    # fits every chip's scoped VMEM default.  Keep >=2 grid steps when rows is
    # large enough so both v7x TensorCores are used.
    if rows <= 8:
        tr = rows                                # single full-extent block
    else:
        tr = min(4096, _round_up(pl.cdiv(rows, 2), 8))
    grid = (pl.cdiv(rows, tr),)

    vmem_need = 4 * (2 * tr * _LANES + 2 * tr * _LANES)   # in + out, 2x buffered
    vmem_limit = int(max(vmem_need + 4 * _MiB, 16 * _MiB))

    w_s = weight.reshape(1, 1).astype(jnp.float32)
    b_s = bias.reshape(1, 1).astype(jnp.float32)

    out2d = pl.pallas_call(
        _fma_kernel,
        out_shape=jax.ShapeDtypeStruct((rows, _LANES), x.dtype),
        grid_spec=pltpu.PrefetchScalarGridSpec(
            num_scalar_prefetch=0,
            grid=grid,
            in_specs=[
                pl.BlockSpec(memory_space=pltpu.MemorySpace.SMEM),  # w scalar
                pl.BlockSpec(memory_space=pltpu.MemorySpace.SMEM),  # b scalar
                pl.BlockSpec((tr, _LANES), lambda i: (i, 0)),       # x tile
            ],
            out_specs=pl.BlockSpec((tr, _LANES), lambda i: (i, 0)),
        ),
        compiler_params=pltpu.CompilerParams(
            dimension_semantics=("parallel",),      # shards across v7x TCs
            vmem_limit_bytes=vmem_limit,
        ),
    )(w_s, b_s, x2d)

    if n_pad == n:
        return out2d.reshape(n, 1)
    return out2d.reshape(-1)[:n].reshape(n, 1)


# ---------------------------------------------------------------------------
# General path: arbitrary D_in / D_out, tiled (N, D_out, K) MXU matmul.
# ---------------------------------------------------------------------------
def _linear_kernel(x_ref, wt_ref, b_ref, o_ref, acc_ref):
    @pl.when(pl.program_id(2) == 0)
    def _():
        acc_ref[...] = jnp.zeros_like(acc_ref)

    # (tn, tk) @ (tk, to): K on sublanes / d_out on lanes -> clean MXU feed,
    # no transpose of W inside the kernel (W was transposed once in the wrapper).
    acc_ref[...] += jnp.dot(
        x_ref[...], wt_ref[...], preferred_element_type=jnp.float32
    )

    @pl.when(pl.program_id(2) == pl.num_programs(2) - 1)
    def _():
        o_ref[...] = (acc_ref[...] + b_ref[...]).astype(o_ref.dtype)


def _linear_general(x, weight, bias):
    n, d_in = x.shape
    d_out = weight.shape[0]

    # One-time MXU-native layout (d_in, d_out); avoids per-grid-step layout
    # changes of W inside the kernel.
    w_t = weight.T
    b2d = bias.reshape(1, d_out)

    # K tiling: full extent when small; otherwise 512-wide with zero padding so
    # partial K blocks never feed garbage into the accumulator.
    if d_in <= 1024:
        tk = d_in
        d_in_p = d_in
    else:
        tk = 512
        d_in_p = _round_up(d_in, tk)
        if d_in_p != d_in:
            x = jnp.pad(x, ((0, 0), (0, d_in_p - d_in)))
            w_t = jnp.pad(w_t, ((0, d_in_p - d_in), (0, 0)))

    # d_out tiling: full extent when small, 256-wide (MXU-native on v6e/v7x)
    # otherwise.  Partial edge blocks only cause masked output writes.
    to = d_out if d_out <= 512 else 256

    # N tiling: multiple of 8, shrunk so double-buffered tiles stay inside a
    # ~12 MiB budget (safe on v5e's 16 MiB scoped default and v7x's 64 MiB
    # VMEM), and split into >=2 grid steps when possible for v7x megacore.
    tn = 512
    while tn > 8 and 4 * (2 * tn * tk + 2 * tn * to) > 12 * _MiB:
        tn //= 2
    if n <= tn:
        tn = _round_up(pl.cdiv(n, 2), 8) if n > 16 else n

    grid = (pl.cdiv(n, tn), pl.cdiv(d_out, to), pl.cdiv(d_in_p, tk))

    vmem_need = 4 * (
        2 * tn * tk + 2 * tk * to + 2 * to + 2 * tn * to + tn * to
    )
    vmem_limit = int(min(max(vmem_need + 4 * _MiB, 16 * _MiB), 32 * _MiB))

    # TODO(synk): for very small d_out (<16) the output stores are still
    # masked <128-lane writes; a generalized lane-dense VPU path would remove
    # that, but the module's real shapes go through the 1x1 fast path.
    return pl.pallas_call(
        _linear_kernel,
        out_shape=jax.ShapeDtypeStruct((n, d_out), x.dtype),
        grid_spec=pltpu.PrefetchScalarGridSpec(
            num_scalar_prefetch=0,
            grid=grid,
            in_specs=[
                pl.BlockSpec((tn, tk), lambda i, j, k: (i, k)),   # x tile
                pl.BlockSpec((tk, to), lambda i, j, k: (k, j)),   # W^T tile
                pl.BlockSpec((1, to), lambda i, j, k: (0, j)),    # bias tile
            ],
            out_specs=pl.BlockSpec((tn, to), lambda i, j, k: (i, j)),
            scratch_shapes=[pltpu.VMEM((tn, to), jnp.float32)],
        ),
        compiler_params=pltpu.CompilerParams(
            dimension_semantics=("parallel", "parallel", "arbitrary"),
            vmem_limit_bytes=vmem_limit,
        ),
    )(x, w_t, b2d)


def ann_regression_forward(x, weight, bias):
    """Pallas equivalent of ANN_regression.forward.

    x:      [N, input_dim]            float32
    weight: [output_dim, input_dim]   float32 (PyTorch nn.Linear convention)
    bias:   [output_dim]              float32
    returns [N, output_dim]           float32
    """
    d_out, d_in = weight.shape
    if d_in == 1 and d_out == 1:
        return _linear_1x1(x, weight, bias)
    return _linear_general(x, weight, bias)


if __name__ == "__main__":
    key = jax.random.PRNGKey(0)
    k_x, k_w, k_b, k_x2, k_w2, k_b2, k_x3, k_w3, k_b3 = jax.random.split(key, 9)

    # --- Case 1: the shapes the module actually uses (x.reshape(-1, 1)). ----
    input_dim, output_dim = 1, 1
    batch = 8
    weight = jax.random.normal(k_w, (output_dim, input_dim), dtype=jnp.float32)
    bias = jax.random.normal(k_b, (output_dim,), dtype=jnp.float32)
    x = jax.random.normal(k_x, (batch,), dtype=jnp.float32).reshape(-1, 1)

    out = jax.block_until_ready(ann_regression_forward(x, weight, bias))
    ref = x @ weight.T + bias
    assert out.shape == (batch, output_dim)
    assert jnp.allclose(out, ref, atol=1e-5, rtol=1e-5)

    # --- Case 2: general MXU path, small shapes (single K block). ----------
    n2, d_in2, d_out2 = 64, 16, 4
    w2 = jax.random.normal(k_w2, (d_out2, d_in2), dtype=jnp.float32)
    b2 = jax.random.normal(k_b2, (d_out2,), dtype=jnp.float32)
    x2 = jax.random.normal(k_x2, (n2, d_in2), dtype=jnp.float32)

    out2 = jax.block_until_ready(ann_regression_forward(x2, w2, b2))
    ref2 = jnp.dot(x2, w2.T, precision=jax.lax.Precision.HIGHEST) + b2
    assert out2.shape == (n2, d_out2)
    assert jnp.allclose(out2, ref2, atol=1e-3, rtol=1e-3)

    # --- Case 3: general path with K tiling + zero-padded ragged K. --------
    n3, d_in3, d_out3 = 128, 1280, 8
    w3 = jax.random.normal(k_w3, (d_out3, d_in3), dtype=jnp.float32)
    b3 = jax.random.normal(k_b3, (d_out3,), dtype=jnp.float32)
    x3 = jax.random.normal(k_x3, (n3, d_in3), dtype=jnp.float32)

    out3 = jax.block_until_ready(ann_regression_forward(x3, w3, b3))
    ref3 = jnp.dot(x3, w3.T, precision=jax.lax.Precision.HIGHEST) + b3
    assert out3.shape == (n3, d_out3)
    assert jnp.allclose(out3, ref3, atol=1e-3, rtol=1e-3)

    print("KERNEL_OK")
</pallas_src>

<mosaic_0001>
module attributes {stable_mosaic.version = 11 : i64} {
  func.func @_fma_kernel(%arg0: i32, %arg1: memref<1x1xf32, #tpu.memory_space<smem>>, %arg2: memref<1x1xf32, #tpu.memory_space<smem>>, %arg3: memref<1x128xf32, #tpu.memory_space<vmem>>, %arg4: memref<1x128xf32, #tpu.memory_space<vmem>>) attributes {dimension_semantics = [#tpu.dimension_semantics<parallel>], iteration_bounds = array<i64: 1>, scalar_prefetch = 0 : i64, scratch_operands = 0 : i64, tpu.core_type = #tpu.core_type<tc>, window_params = [{transform_indices = @transform_0, window_bounds = array<i64: 1, 1>}, {transform_indices = @transform_1, window_bounds = array<i64: 1, 1>}, {transform_indices = @transform_2, window_bounds = array<i64: 1, 128>}, {transform_indices = @transform_3, window_bounds = array<i64: 1, 128>}]} {
    %c0 = arith.constant 0 : index
    %c0_0 = arith.constant 0 : index
    %0 = vector.load %arg3[%c0, %c0_0] : memref<1x128xf32, #tpu.memory_space<vmem>>, vector<1x128xf32>
    %c0_1 = arith.constant 0 : index
    %c0_2 = arith.constant 0 : index
    %1 = memref.load %arg1[%c0_1, %c0_2] : memref<1x1xf32, #tpu.memory_space<smem>>
    %2 = vector.broadcast %1 : f32 to vector<1x128xf32>
    %3 = arith.mulf %0, %2 : vector<1x128xf32>
    %c0_3 = arith.constant 0 : index
    %c0_4 = arith.constant 0 : index
    %4 = memref.load %arg2[%c0_3, %c0_4] : memref<1x1xf32, #tpu.memory_space<smem>>
    %5 = vector.broadcast %4 : f32 to vector<1x128xf32>
    %6 = arith.addf %3, %5 : vector<1x128xf32>
    %c0_5 = arith.constant 0 : index
    %c0_6 = arith.constant 0 : index
    %7 = vector.load %arg4[%c0_5, %c0_6] : memref<1x128xf32, #tpu.memory_space<vmem>>, vector<1x128xf32>
    tpu.vector_store %arg4[%c0_5, %c0_6], %6 {strides = array<i32>} : memref<1x128xf32, #tpu.memory_space<vmem>>, vector<1x128xf32>,
    return
  }
  func.func @transform_0(%arg0: i32) -> (i32, i32) {
    %c0_i32 = arith.constant 0 : i32
    %c0_i32_0 = arith.constant 0 : i32
    %c0_i32_1 = arith.constant 0 : i32
    return %c0_i32, %c0_i32_0 : i32, i32
  }
  func.func @transform_1(%arg0: i32) -> (i32, i32) {
    %c0_i32 = arith.constant 0 : i32
    %c0_i32_0 = arith.constant 0 : i32
    %c0_i32_1 = arith.constant 0 : i32
    return %c0_i32, %c0_i32_0 : i32, i32
  }
  func.func @transform_2(%arg0: i32) -> (i32, i32) {
    %c0_i32 = arith.constant 0 : i32
    %c0_i32_0 = arith.constant 0 : i32
    return %arg0, %c0_i32 : i32, i32
  }
  func.func @transform_3(%arg0: i32) -> (i32, i32) {
    %c0_i32 = arith.constant 0 : i32
    %c0_i32_0 = arith.constant 0 : i32
    return %arg0, %c0_i32 : i32, i32
  }
}

</mosaic_0001>

<llo_original>
// kernel: tpu_custom_call.1
$region0: #{tpu_custom_call.1}
  #allocation0 [shape = 'u32[]', space=smem, size = 0x4, offset = 0x4, fixed_abs, tag = 'smem constant byte address 0x4 - core index']
  #allocation1 [shape = 'u32[144,128]{1,0:T(1,128)}', space=vmem, size = 0x12000, scoped, tag = 'internal scratch']
  #allocation2 [shape = 'f32[1,1]{1,0:T(1,128)S(6)}', space=smem, size = 0x200, scoped, tag = 'scoped memory for tpu_custom_call.1']
  #allocation3 [shape = 'f32[1,1]{1,0:T(1,128)S(6)}', space=smem, size = 0x200, scoped, tag = 'scoped memory for tpu_custom_call.1']
  %s0 = inlined_call_operand.<no memory space> [shape: f32[1,1], index: 0, kind: input, shape index: {}]
  %s1 = inlined_call_operand.<no memory space> [shape: f32[1,1], index: 1, kind: input, shape index: {}]
  %s2 = inlined_call_operand.vmem [shape: f32[1,128], index: 2, kind: input, shape index: {}]
  %s3 = inlined_call_operand.hbm [shape: f32[1,128], index: 3, kind: output, shape index: {}]
  %s4 = sld [smem:[#allocation0]]
  $region22: #{tpu_custom_call.1} parent=0
    _
  %s6 = ssub.s32 1, %s4
  %s7 = scalar_select 0, %s6, %s4
  %8 = sst [smem:[#allocation2]] %s0
  %9 = sst [smem:[#allocation3]] %s1
  $region1: #{tpu_custom_call.1} parent=0
    #allocation4 [shape = 'u8[512]{0}', space=vmem, size = 0x400, scoped, tag = 'output window, operand 0, single buffered']
    #allocation5 [shape = 's32[1]{0}', space=sflag, size = 0x4, scoped, tag = 'scoped memory for tpu_custom_call.1']
    %10 = vsyncpa [#allocation5], 0
    // Predicated region
    $region2: #{tpu_custom_call.1} parent=1 // pred_check
      _
    $region3: #{tpu_custom_call.1} parent=1 // pred_check_branch
      %12 = sbr.rel (0) target = $region5
    $region4: #{tpu_custom_call.1} parent=1 // pred_region
      _
    $region5: #{tpu_custom_call.1} parent=1 // pred_fallthru
      _
    // Predicated region
    $region6: #{tpu_custom_call.1} parent=1 // pred_check
      _
    $region7: #{tpu_custom_call.1} parent=1 // pred_check_branch
      %14 = sbr.rel (0) target = $region9
    $region8: #{tpu_custom_call.1} parent=1 // pred_region
      _
    $region9: #{tpu_custom_call.1} parent=1 // pred_fallthru
      _
    // Predicated region
    $region10: #{tpu_custom_call.1} parent=1 // pred_check
      _
    $region11: #{tpu_custom_call.1} parent=1 // pred_check_branch
      %16 = sbr.rel (0) target = $region13
    $region12: #{tpu_custom_call.1} parent=1 // pred_region
      _
    $region13: #{tpu_custom_call.1} parent=1 // pred_fallthru
      _
    %v17 = vld [vmem:[%s2] sm:$0x1]
    %s18 = sld [smem:[#allocation2]]
    %v19 = vstv %s18
    %v20 = vmul.f32 %v17, %v19
    %s21 = sld [smem:[#allocation3]]
    %v22 = vstv %s21
    %v23 = vadd.f32 %v20, %v22
    %24 = vst [vmem:[#allocation4] sm:$0x1] %v23
    // Predicated region
    $region14: #{tpu_custom_call.1} parent=1 // pred_check
      _
    $region15: #{tpu_custom_call.1} parent=1 // pred_check_branch
      %26 = sbr.rel (0) target = $region17
    $region16: #{tpu_custom_call.1} parent=1 // pred_region
      %s28 = ssub.s32 16, 16
      %29 = vsyncadd [#allocation5], %s28
      %s31 = sshll.u32 [#allocation4], 4
      %s32 = int_to_ptr.vmem [resolvable:$true] %s31
      %34 = dma.vmem_to_hbm [thread:$0]  %s32, 16, %s3, [#allocation5]
    $region17: #{tpu_custom_call.1} parent=1 // pred_fallthru
      _
    // Predicated region
    $region18: #{tpu_custom_call.1} parent=1 // pred_check
      _
    $region19: #{tpu_custom_call.1} parent=1 // pred_check_branch
      %36 = sbr.rel (0) target = $region21
    $region20: #{tpu_custom_call.1} parent=1 // pred_region
      %37 = dma.done [#allocation5], 16
    $region21: #{tpu_custom_call.1} parent=1 // pred_fallthru
      _
    %38 = vsyncpa [#allocation5], 1

</llo_original>
